<compile_context>
chip_gen: v7x
topology: tpu7x:2x2x1
jax: 0.10.0
libtpu: 0.0.40
codegen_flags: <defaults>
</compile_context>

<pallas_src>
import jax
import jax.numpy as jnp
import numpy as np
from jax.experimental import pallas as pl
from jax.experimental.pallas import tpu as pltpu


def _make_block_kernel(H, W, C_in, C_out):
    WC_in = W * C_in
    WC_out = W * C_out

    def block_kernel(a_ref, b_ref, wmat_ref, bias_ref, o_ref):
        # a_ref:    (1, H, W*C_in)        lane-dense conv input (unpadded)
        # b_ref:    (1, H, W*C_in)        lane-dense pool input (unpadded)
        # wmat_ref: (3*W*C_in, W*C_out)   block-banded lane-dense conv matrix
        # bias_ref: (1, W*C_out)          bias tiled over W along the lane axis
        # o_ref:    (1, H, W*C_out)       lane-dense output
        a = a_ref[0]                                               # (H, WC_in)
        b = b_ref[0]                                               # (H, WC_in)

        # ---------- branch A: relu(conv3x3(a) + bias) as ONE matmul ----------
        # In-kernel H-direction zero padding (two zero rows); the W-direction
        # zero padding lives in the zero structure of wmat.
        zrow = jnp.zeros((1, WC_in), dtype=a.dtype)
        a_pad = jnp.concatenate([zrow, a, zrow], axis=0)           # (H+2, WC_in)
        x_k = jnp.concatenate(
            [a_pad[0:H], a_pad[1:H + 1], a_pad[2:H + 2]], axis=1)  # (H, 3*WC_in)
        conv = jnp.dot(x_k, wmat_ref[...],
                       preferred_element_type=jnp.float32)         # (H, WC_out)
        conv = jnp.maximum(conv + bias_ref[...], 0.0)

        # ---------- branch B: 3x3 max pool, stride 1, replicate padding ------
        # Separable max.  Horizontal neighbours are +/-C_in lane shifts
        # (lowered to an XLU lane rotate); concatenating the edge column back
        # in implements the replicate clamp directly.
        nxt = jnp.concatenate(                      # value at spatial w+1
            [b[:, C_in:], b[:, WC_in - C_in:]], axis=1)            # (H, WC_in)
        prv = jnp.concatenate(                      # value at spatial w-1
            [b[:, :C_in], b[:, :WC_in - C_in]], axis=1)            # (H, WC_in)
        hmax = jnp.maximum(jnp.maximum(b, nxt), prv)               # (H, WC_in)
        hmax_pad = jnp.concatenate(                 # replicate rows (H dir)
            [hmax[0:1], hmax, hmax[H - 1:H]], axis=0)              # (H+2, WC_in)
        pooled = jnp.maximum(
            jnp.maximum(hmax_pad[0:H], hmax_pad[1:H + 1]),
            hmax_pad[2:H + 2])                                     # (H, WC_in)

        # ---------- combine (alignment is identity: identical shapes) --------
        o_ref[0] = (conv + pooled).astype(o_ref.dtype)

    return block_kernel


def _lane_dense_conv_matrix(weight_hwio, W):
    """Fold a (3,3,C_in,C_out) 'same' conv into a (3*W*C_in, W*C_out) matrix.

    With x_k[h, dy*W*C_in + w_in*C_in + ci] = a[h+dy-1, w_in, ci] (zero rows
    for out-of-range h), conv3x3(a)[h, w_out, co] == (x_k @ Wmat)[h, w_out*C_out+co].
    The W-direction zero padding is implicit in the zeros of Wmat.
    One-time host-side prep (glue, not jitted).
    """
    kH, kW, C_in, C_out = weight_hwio.shape
    w_np = np.asarray(weight_hwio, dtype=np.float32)
    wmat = np.zeros((kH * W * C_in, W * C_out), dtype=np.float32)
    for dy in range(kH):
        for dx in range(kW):
            for w_out in range(W):
                w_in = w_out + dx - 1
                if 0 <= w_in < W:
                    r = dy * W * C_in + w_in * C_in
                    c = w_out * C_out
                    wmat[r:r + C_in, c:c + C_out] = w_np[dy, dx]
    return jnp.asarray(wmat)


def block_forward(x_a_nchw, x_b_nchw, weight_hwio, bias):
    """Block.forward for the fixed (conv3x3 + relu, maxpool3x3) configuration."""
    N, C_in, H, W = x_a_nchw.shape
    kH, kW, _, C_out = weight_hwio.shape
    assert (kH, kW) == (3, 3) and C_out == C_in  # Conv2d(C, C, 3, padding=1)
    WC_in, WC_out = W * C_in, W * C_out

    # glue: NCHW -> lane-dense (N, H, W*C) with channels fastest on the lanes
    a = jnp.transpose(x_a_nchw, (0, 2, 3, 1)).reshape(N, H, WC_in)
    b = jnp.transpose(x_b_nchw, (0, 2, 3, 1)).reshape(N, H, WC_in)

    # one-time host-side weight/bias prep (glue)
    wmat = _lane_dense_conv_matrix(weight_hwio, W)                  # (3*WC_in, WC_out)
    bias_ld = jnp.tile(bias.astype(jnp.float32), (W,)).reshape(1, WC_out)

    kernel = _make_block_kernel(H, W, C_in, C_out)

    out = pl.pallas_call(
        kernel,
        out_shape=jax.ShapeDtypeStruct((N, H, WC_out), x_a_nchw.dtype),
        grid=(N,),
        in_specs=[
            pl.BlockSpec((1, H, WC_in), lambda n: (n, 0, 0)),
            pl.BlockSpec((1, H, WC_in), lambda n: (n, 0, 0)),
            pl.BlockSpec((3 * WC_in, WC_out), lambda n: (0, 0)),
            pl.BlockSpec((1, WC_out), lambda n: (0, 0)),
        ],
        out_specs=pl.BlockSpec((1, H, WC_out), lambda n: (n, 0, 0)),
        compiler_params=pltpu.CompilerParams(
            dimension_semantics=("parallel",)),   # batch across TCs on v7x
    )(a, b, wmat, bias_ld)

    # lane-dense -> NCHW to match the PyTorch output layout
    return jnp.transpose(out.reshape(N, H, W, C_out), (0, 3, 1, 2))


def _reference(x_a_nchw, x_b_nchw, weight_hwio, bias):
    """Pure-JAX reference of the same forward pass (for verification)."""
    a = jnp.transpose(x_a_nchw, (0, 2, 3, 1))
    b = jnp.transpose(x_b_nchw, (0, 2, 3, 1))
    conv = jax.lax.conv_general_dilated(
        a, weight_hwio, window_strides=(1, 1), padding="SAME",
        dimension_numbers=("NHWC", "HWIO", "NHWC"))
    conv = jnp.maximum(conv + bias[None, None, None, :], 0.0)
    b_pad = jnp.pad(b, ((0, 0), (1, 1), (1, 1), (0, 0)), mode="edge")
    pooled = jax.lax.reduce_window(
        b_pad, -jnp.inf, jax.lax.max, (1, 3, 3, 1), (1, 1, 1, 1), "VALID")
    out = conv + pooled
    return jnp.transpose(out, (0, 3, 1, 2))


if __name__ == "__main__":
    # deterministic small shapes: batch=2, channels=8, spatial=16 (NCHW)
    # -> W * C = 128 maps exactly onto the 128-lane axis.
    N, C, H, W = 2, 8, 16, 16
    key = jax.random.PRNGKey(0)
    k_a, k_b, k_w, k_bias = jax.random.split(key, 4)

    input_a = jax.random.normal(k_a, (N, C, H, W), dtype=jnp.float32)
    input_b = jax.random.normal(k_b, (N, C, H, W), dtype=jnp.float32)

    # Conv2d(C, C, kernel_size=3, padding=1) parameters, deterministic init
    # (PyTorch-style kaiming-uniform bound), stored as HWIO for the kernel.
    fan_in = C * 3 * 3
    bound = 1.0 / np.sqrt(fan_in)
    weight_hwio = jax.random.uniform(
        k_w, (3, 3, C, C), dtype=jnp.float32, minval=-bound, maxval=bound)
    bias = jax.random.uniform(
        k_bias, (C,), dtype=jnp.float32, minval=-bound, maxval=bound)

    out = block_forward(input_a, input_b, weight_hwio, bias)
    out = jax.block_until_ready(out)

    ref = _reference(input_a, input_b, weight_hwio, bias)
    np.testing.assert_allclose(np.asarray(out), np.asarray(ref),
                               rtol=1e-4, atol=1e-4)

    # TODO(synk): `_align_tensor` / random op selection are NAS plumbing; this
    # kernel fixes one deterministic (conv3x3 + maxpool3x3) Block config where
    # alignment is the identity.
    print("KERNEL_OK")
</pallas_src>

<mosaic_0001>
module attributes {stable_mosaic.version = 11 : i64} {
  func.func @block_kernel(%arg0: i32, %arg1: memref<1x16x128xf32, #tpu.memory_space<vmem>>, %arg2: memref<1x16x128xf32, #tpu.memory_space<vmem>>, %arg3: memref<384x128xf32, #tpu.memory_space<vmem>>, %arg4: memref<1x128xf32, #tpu.memory_space<vmem>>, %arg5: memref<1x16x128xf32, #tpu.memory_space<vmem>>) attributes {dimension_semantics = [#tpu.dimension_semantics<parallel>], iteration_bounds = array<i64: 2>, scalar_prefetch = 0 : i64, scratch_operands = 0 : i64, tpu.core_type = #tpu.core_type<tc>, window_params = [{transform_indices = @transform_0, window_bounds = array<i64: 1, 16, 128>}, {transform_indices = @transform_1, window_bounds = array<i64: 1, 16, 128>}, {pipeline_mode = #tpu.pipeline_mode<synchronous>, transform_indices = @transform_2, window_bounds = array<i64: 384, 128>}, {pipeline_mode = #tpu.pipeline_mode<synchronous>, transform_indices = @transform_3, window_bounds = array<i64: 1, 128>}, {transform_indices = @transform_4, window_bounds = array<i64: 1, 16, 128>}]} {
    %c0 = arith.constant 0 : index
    %c0_0 = arith.constant 0 : index
    %c0_1 = arith.constant 0 : index
    %0 = vector.load %arg1[%c0, %c0_0, %c0_1] : memref<1x16x128xf32, #tpu.memory_space<vmem>>, vector<1x16x128xf32>
    %1 = vector.shape_cast %0 : vector<1x16x128xf32> to vector<16x128xf32>
    %c0_2 = arith.constant 0 : index
    %c0_3 = arith.constant 0 : index
    %c0_4 = arith.constant 0 : index
    %2 = vector.load %arg2[%c0_2, %c0_3, %c0_4] : memref<1x16x128xf32, #tpu.memory_space<vmem>>, vector<1x16x128xf32>
    %3 = vector.shape_cast %2 : vector<1x16x128xf32> to vector<16x128xf32>
    %cst = arith.constant 0.000000e+00 : f32
    %4 = vector.broadcast %cst : f32 to vector<1x128xf32>
    %5 = tpu.concatenate %4, %1, %4 in 0 : vector<1x128xf32>, vector<16x128xf32>, vector<1x128xf32> -> vector<18x128xf32>
    %6 = vector.extract_strided_slice %5 {offsets = [0, 0], sizes = [16, 128], strides = [1, 1]} : vector<18x128xf32> to vector<16x128xf32>
    %7 = vector.extract_strided_slice %5 {offsets = [1, 0], sizes = [16, 128], strides = [1, 1]} : vector<18x128xf32> to vector<16x128xf32>
    %8 = vector.extract_strided_slice %5 {offsets = [2, 0], sizes = [16, 128], strides = [1, 1]} : vector<18x128xf32> to vector<16x128xf32>
    %9 = tpu.concatenate %6, %7, %8 in 1 : vector<16x128xf32>, vector<16x128xf32>, vector<16x128xf32> -> vector<16x384xf32>
    %c0_5 = arith.constant 0 : index
    %c0_6 = arith.constant 0 : index
    %10 = vector.load %arg3[%c0_5, %c0_6] : memref<384x128xf32, #tpu.memory_space<vmem>>, vector<384x128xf32>
    %cst_7 = arith.constant dense<0.000000e+00> : vector<16x128xf32>
    %11 = tpu.matmul %9, %10, %cst_7 {dimension_numbers = #tpu.dot_dimension_numbers<[1], [0], [0], [1], [0, 0, 1, 1], [], []>} : vector<16x384xf32>, vector<384x128xf32>, vector<16x128xf32> -> vector<16x128xf32>
    %c0_8 = arith.constant 0 : index
    %c0_9 = arith.constant 0 : index
    %12 = vector.load %arg4[%c0_8, %c0_9] : memref<1x128xf32, #tpu.memory_space<vmem>>, vector<1x128xf32>
    %13 = vector.broadcast %12 : vector<1x128xf32> to vector<16x128xf32>
    %14 = arith.addf %11, %13 : vector<16x128xf32>
    %cst_10 = arith.constant 0.000000e+00 : f32
    %15 = vector.broadcast %cst_10 : f32 to vector<16x128xf32>
    %16 = arith.maximumf %14, %15 : vector<16x128xf32>
    %17 = vector.extract_strided_slice %3 {offsets = [0, 8], sizes = [16, 120], strides = [1, 1]} : vector<16x128xf32> to vector<16x120xf32>
    %18 = vector.extract_strided_slice %3 {offsets = [0, 120], sizes = [16, 8], strides = [1, 1]} : vector<16x128xf32> to vector<16x8xf32>
    %19 = tpu.concatenate %17, %18 in 1 : vector<16x120xf32>, vector<16x8xf32> -> vector<16x128xf32>
    %20 = vector.extract_strided_slice %3 {offsets = [0, 0], sizes = [16, 8], strides = [1, 1]} : vector<16x128xf32> to vector<16x8xf32>
    %21 = vector.extract_strided_slice %3 {offsets = [0, 0], sizes = [16, 120], strides = [1, 1]} : vector<16x128xf32> to vector<16x120xf32>
    %22 = tpu.concatenate %20, %21 in 1 : vector<16x8xf32>, vector<16x120xf32> -> vector<16x128xf32>
    %23 = arith.maximumf %3, %19 : vector<16x128xf32>
    %24 = arith.maximumf %23, %22 : vector<16x128xf32>
    %25 = vector.extract_strided_slice %24 {offsets = [0, 0], sizes = [1, 128], strides = [1, 1]} : vector<16x128xf32> to vector<1x128xf32>
    %26 = vector.extract_strided_slice %24 {offsets = [15, 0], sizes = [1, 128], strides = [1, 1]} : vector<16x128xf32> to vector<1x128xf32>
    %27 = tpu.concatenate %25, %24, %26 in 0 : vector<1x128xf32>, vector<16x128xf32>, vector<1x128xf32> -> vector<18x128xf32>
    %28 = vector.extract_strided_slice %27 {offsets = [0, 0], sizes = [16, 128], strides = [1, 1]} : vector<18x128xf32> to vector<16x128xf32>
    %29 = vector.extract_strided_slice %27 {offsets = [1, 0], sizes = [16, 128], strides = [1, 1]} : vector<18x128xf32> to vector<16x128xf32>
    %30 = arith.maximumf %28, %29 : vector<16x128xf32>
    %31 = vector.extract_strided_slice %27 {offsets = [2, 0], sizes = [16, 128], strides = [1, 1]} : vector<18x128xf32> to vector<16x128xf32>
    %32 = arith.maximumf %30, %31 : vector<16x128xf32>
    %33 = arith.addf %16, %32 : vector<16x128xf32>
    %c0_11 = arith.constant 0 : index
    %c0_12 = arith.constant 0 : index
    %c0_13 = arith.constant 0 : index
    %34 = vector.load %arg5[%c0_11, %c0_12, %c0_13] : memref<1x16x128xf32, #tpu.memory_space<vmem>>, vector<1x16x128xf32>
    %35 = vector.shape_cast %34 : vector<1x16x128xf32> to vector<16x128xf32>
    %36 = vector.shape_cast %33 : vector<16x128xf32> to vector<1x16x128xf32>
    tpu.vector_store %arg5[%c0_11, %c0_12, %c0_13], %36 {strides = array<i32>} : memref<1x16x128xf32, #tpu.memory_space<vmem>>, vector<1x16x128xf32>,
    return
  }
  func.func @transform_0(%arg0: i32) -> (i32, i32, i32) {
    %c0_i32 = arith.constant 0 : i32
    %c0_i32_0 = arith.constant 0 : i32
    %c0_i32_1 = arith.constant 0 : i32
    return %arg0, %c0_i32, %c0_i32_0 : i32, i32, i32
  }
  func.func @transform_1(%arg0: i32) -> (i32, i32, i32) {
    %c0_i32 = arith.constant 0 : i32
    %c0_i32_0 = arith.constant 0 : i32
    %c0_i32_1 = arith.constant 0 : i32
    return %arg0, %c0_i32, %c0_i32_0 : i32, i32, i32
  }
  func.func @transform_2(%arg0: i32) -> (i32, i32) {
    %c0_i32 = arith.constant 0 : i32
    %c0_i32_0 = arith.constant 0 : i32
    %c0_i32_1 = arith.constant 0 : i32
    return %c0_i32, %c0_i32_0 : i32, i32
  }
  func.func @transform_3(%arg0: i32) -> (i32, i32) {
    %c0_i32 = arith.constant 0 : i32
    %c0_i32_0 = arith.constant 0 : i32
    %c0_i32_1 = arith.constant 0 : i32
    return %c0_i32, %c0_i32_0 : i32, i32
  }
  func.func @transform_4(%arg0: i32) -> (i32, i32, i32) {
    %c0_i32 = arith.constant 0 : i32
    %c0_i32_0 = arith.constant 0 : i32
    %c0_i32_1 = arith.constant 0 : i32
    return %arg0, %c0_i32, %c0_i32_0 : i32, i32, i32
  }
}

</mosaic_0001>

<llo_original>
// kernel: tpu_custom_call.1
$region0: #{tpu_custom_call.1}
  #allocation0 [shape = 'u32[]', space=smem, size = 0x4, offset = 0x4, fixed_abs, tag = 'smem constant byte address 0x4 - core index']
  #allocation1 [shape = 'u32[144,128]{1,0:T(1,128)}', space=vmem, size = 0x12000, scoped, tag = 'internal scratch']
  %s0 = inlined_call_operand.hbm [shape: f32[2,16,128], index: 0, kind: input, shape index: {}]
  %s1 = inlined_call_operand.hbm [shape: f32[2,16,128], index: 1, kind: input, shape index: {}]
  %s2 = inlined_call_operand.hbm [shape: f32[384,128], index: 2, kind: input, shape index: {}]
  %s3 = inlined_call_operand.vmem [shape: f32[1,128], index: 3, kind: input, shape index: {}]
  %s4 = inlined_call_operand.hbm [shape: f32[2,16,128], index: 4, kind: output, shape index: {}]
  %s5 = sld [smem:[#allocation0]]
  $region61: #{tpu_custom_call.1} parent=0
    _
  %s7 = ssub.s32 1, %s5
  %s8 = scalar_select 0, %s7, %s5
  $region1: #{tpu_custom_call.1} parent=0
    #allocation2 [shape = 'u8[16384]{0}', space=vmem, size = 0x4000, scoped, tag = 'input window, operand 0']
    #allocation3 [shape = 's32[2]{0}', space=sflag, size = 0x8, scoped, tag = 'scoped memory for tpu_custom_call.1']
    #allocation4 [shape = 's32[2]{0}', space=sflag, size = 0x8, scoped, tag = 'scoped memory for tpu_custom_call.1']
    #allocation5 [shape = 'u8[16384]{0}', space=vmem, size = 0x4000, scoped, tag = 'input window, operand 1']
    #allocation6 [shape = 's32[2]{0}', space=sflag, size = 0x8, scoped, tag = 'scoped memory for tpu_custom_call.1']
    #allocation7 [shape = 'u8[196608]{0}', space=vmem, size = 0x30000, scoped, tag = 'input window, operand 2, single buffered']
    #allocation8 [shape = 'u8[16384]{0}', space=vmem, size = 0x4000, scoped, tag = 'output window, operand 0']
    %9 = vsyncpa [#allocation3], 0
    %s10 = scalar_lea.sflag [#allocation3], 1
    %11 = vsyncpa %s10, 0
    %12 = vsyncpa [#allocation6], 0
    %s13 = scalar_lea.sflag [#allocation6], 1
    %14 = vsyncpa %s13, 0
    %15 = vsyncpa [#allocation4], 0
    %s16 = scalar_lea.sflag [#allocation4], 1
    %17 = vsyncpa %s16, 0
    loop: start=0, step=1, limit=4
    $region2: #{tpu_custom_call.1} parent=1 // loop_pre_header
      _
    $region3: #{tpu_custom_call.1} parent=1 // loop_header
      %s19 = sphi 0, %s23
      %p20 = scmp.ge.s32.totalorder %s19, 4
      %s29 = sphi 0, %s31
      %s32 = sphi 0, %s29
      %s33 = sphi 0, %s32
      %s49 = sphi 0, %s33
      %s55 = sphi 0, %s57
      %s58 = sphi 0, %s55
      %s59 = sphi 0, %s58
      %s75 = sphi 0, %s59
      %s79 = sphi 0, %s79
      %s81 = sphi 0, %s79
      %s82 = sphi 0, %s81
      %s96 = sphi 0, %s82
      %s100 = sphi 0, %s100
      %s102 = sphi 0, %s100
      %s103 = sphi 0, %s102
      %s117 = sphi 0, %s103
      %s123 = sphi 0, %s125
      %s126 = sphi 0, %s123
      %s127 = sphi 0, %s126
      %s143 = sphi 0, %s127
    $region4: #{tpu_custom_call.1} parent=1 // loop_header_branch
      %22 = sbr.rel (%p20) target = $region8
    $region5: #{tpu_custom_call.1} parent=1 // loop_body
      %s24 = ssub.s32 %s19, 1
      %s25 = ssub.s32 %s19, 2
      %s26 = sadd.s32 %s19, 1
      %s27 = ssub.s32 %s19, %s26
      %p28 = scmp.eq.s32.totalorder %s27, 0
      %s30 = sadd.s32 %s29, 1
      %s31 = scalar_select %p28, %s29, %s30
      %p34 = pneg %p28
      %p35 = scmp.eq.s32.totalorder %s19, 1
      %p36 = por %p34, %p35
      %p37 = scmp.ne.s32.totalorder %s29, %s32
      %p38 = scmp.eq.s32.totalorder %s19, 0
      %p39 = por %p37, %p38
      %p40 = scmp.ne.s32.totalorder %s29, %s32
      %p41 = scmp.eq.s32.totalorder %s24, 1
      %p42 = por %p40, %p41
      %p43 = scmp.ne.s32.totalorder %s32, %s33
      %p44 = scmp.eq.s32.totalorder %s24, 0
      %p45 = por %p43, %p44
      %p46 = scmp.ne.s32.totalorder %s32, %s33
      %p47 = scmp.eq.s32.totalorder %s25, 1
      %p48 = por %p46, %p47
      %p50 = scmp.ne.s32.totalorder %s33, %s49
      %p51 = scmp.eq.s32.totalorder %s25, 0
      %p52 = por %p50, %p51
      %s53 = ssub.s32 %s19, %s26
      %p54 = scmp.eq.s32.totalorder %s53, 0
      %s56 = sadd.s32 %s55, 1
      %s57 = scalar_select %p54, %s55, %s56
      %p60 = pneg %p54
      %p61 = scmp.eq.s32.totalorder %s19, 1
      %p62 = por %p60, %p61
      %p63 = scmp.ne.s32.totalorder %s55, %s58
      %p64 = scmp.eq.s32.totalorder %s19, 0
      %p65 = por %p63, %p64
      %p66 = scmp.ne.s32.totalorder %s55, %s58
      %p67 = scmp.eq.s32.totalorder %s24, 1
      %p68 = por %p66, %p67
      %p69 = scmp.ne.s32.totalorder %s58, %s59
      %p70 = scmp.eq.s32.totalorder %s24, 0
      %p71 = por %p69, %p70
      %p72 = scmp.ne.s32.totalorder %s58, %s59
      %p73 = scmp.eq.s32.totalorder %s25, 1
      %p74 = por %p72, %p73
      %p76 = scmp.ne.s32.totalorder %s59, %s75
      %p77 = scmp.eq.s32.totalorder %s25, 0
      %p78 = por %p76, %p77
      %s80 = sadd.s32 %s79, 1
      %p83 = scmp.eq.s32.totalorder %s19, 1
      %p84 = scmp.ne.s32.totalorder %s79, %s81
      %p85 = scmp.eq.s32.totalorder %s19, 0
      %p86 = por %p84, %p85
      %p87 = scmp.ne.s32.totalorder %s79, %s81
      %p88 = scmp.eq.s32.totalorder %s24, 1
      %p89 = por %p87, %p88
      %p90 = scmp.ne.s32.totalorder %s81, %s82
      %p91 = scmp.eq.s32.totalorder %s24, 0
      %p92 = por %p90, %p91
      %p93 = scmp.ne.s32.totalorder %s81, %s82
      %p94 = scmp.eq.s32.totalorder %s25, 1
      %p95 = por %p93, %p94
      %p97 = scmp.ne.s32.totalorder %s82, %s96
      %p98 = scmp.eq.s32.totalorder %s25, 0
      %p99 = por %p97, %p98
      %s101 = sadd.s32 %s100, 1
      %p104 = scmp.eq.s32.totalorder %s19, 1
      %p105 = scmp.ne.s32.totalorder %s100, %s102
      %p106 = scmp.eq.s32.totalorder %s19, 0
      %p107 = por %p105, %p106
      %p108 = scmp.ne.s32.totalorder %s100, %s102
      %p109 = scmp.eq.s32.totalorder %s24, 1
      %p110 = por %p108, %p109
      %p111 = scmp.ne.s32.totalorder %s102, %s103
      %p112 = scmp.eq.s32.totalorder %s24, 0
      %p113 = por %p111, %p112
      %p114 = scmp.ne.s32.totalorder %s102, %s103
      %p115 = scmp.eq.s32.totalorder %s25, 1
      %p116 = por %p114, %p115
      %p118 = scmp.ne.s32.totalorder %s103, %s117
      %p119 = scmp.eq.s32.totalorder %s25, 0
      %p120 = por %p118, %p119
      %s121 = ssub.s32 %s19, %s26
      %p122 = scmp.eq.s32.totalorder %s121, 0
      %s124 = sadd.s32 %s123, 1
      %s125 = scalar_select %p122, %s123, %s124
      %p128 = pneg %p122
      %p129 = scmp.eq.s32.totalorder %s19, 1
      %p130 = por %p128, %p129
      %p131 = scmp.ne.s32.totalorder %s123, %s126
      %p132 = scmp.eq.s32.totalorder %s19, 0
      %p133 = por %p131, %p132
      %p134 = scmp.ne.s32.totalorder %s123, %s126
      %p135 = scmp.eq.s32.totalorder %s24, 1
      %p136 = por %p134, %p135
      %p137 = scmp.ne.s32.totalorder %s126, %s127
      %p138 = scmp.eq.s32.totalorder %s24, 0
      %p139 = por %p137, %p138
      %p140 = scmp.ne.s32.totalorder %s126, %s127
      %p141 = scmp.eq.s32.totalorder %s25, 1
      %p142 = por %p140, %p141
      %p144 = scmp.ne.s32.totalorder %s127, %s143
      %p145 = scmp.eq.s32.totalorder %s25, 0
      %p146 = por %p144, %p145
      %p147 = scmp.le.s32.totalorder 1, %s19
      %p148 = scmp.lt.s32.totalorder %s19, 3
      %p149 = pnand %p147, %p148
      %p150 = pneg %p149
      // Predicated region
      $region9: #{tpu_custom_call.1} parent=5 // pred_check
        _
      $region10: #{tpu_custom_call.1} parent=5 // pred_check_branch
        %152 = sbr.rel (%p149) target = $region12
      $region11: #{tpu_custom_call.1} parent=5 // pred_region
        %s153 = ssub.s32 %s19, 1
        // Predicated region
        $region13: #{tpu_custom_call.1} parent=11 // pred_check
          %p154 = pneg %p92
        $region14: #{tpu_custom_call.1} parent=11 // pred_check_branch
          %156 = sbr.rel (%p154) target = $region16
        $region15: #{tpu_custom_call.1} parent=11 // pred_region
          %s158 = ssub.s32 6144, 6144
          %159 = vsyncadd [#allocation6], %s158
          %s160 = sshll.u32 [#allocation7], 4
          %s161 = int_to_ptr.vmem [resolvable:$true] %s160
          %166 = dma.hbm_to_vmem [thread:$0]  %s2, 6144, %s161, [#allocation6], 128, 128, 8
        $region16: #{tpu_custom_call.1} parent=11 // pred_fallthru
          _
        // Predicated region
        $region17: #{tpu_custom_call.1} parent=11 // pred_check
          %p167 = pneg %p113
        $region18: #{tpu_custom_call.1} parent=11 // pred_check_branch
          %169 = sbr.rel (%p167) target = $region20
        $region19: #{tpu_custom_call.1} parent=11 // pred_region
          _
        $region20: #{tpu_custom_call.1} parent=11 // pred_fallthru
          _
      $region12: #{tpu_custom_call.1} parent=5 // pred_fallthru
        _
      %p170 = scmp.lt.s32.totalorder %s19, 2
      // Predicated region
      $region21: #{tpu_custom_call.1} parent=5 // pred_check
        %p171 = pneg %p170
      $region22: #{tpu_custom_call.1} parent=5 // pred_check_branch
        %173 = sbr.rel (%p171) target = $region24
      $region23: #{tpu_custom_call.1} parent=5 // pred_region
        // Predicated region
        $region25: #{tpu_custom_call.1} parent=23 // pred_check
          %p174 = pneg %p39
        $region26: #{tpu_custom_call.1} parent=23 // pred_check_branch
          %176 = sbr.rel (%p174) target = $region28
        $region27: #{tpu_custom_call.1} parent=23 // pred_region
          %s177 = sand.u32 %s29, 1
          %s178 = scalar_lea.sflag [#allocation3], %s177
          %s179 = sand.u32 %s29, 1
          %s180 = smul.addr %s179, 16
          %s181 = scalar_lea.vmem [#allocation2], %s180
          %s183 = ssub.s32 256, 256
          %184 = vsyncadd %s178, %s183
          %s185 = smul.addr %s19, 2
          %s186 = smul.addr %s185, 128
          %s187 = scalar_lea.hbm %s0, %s186
          %s188 = sshll.u32 %s181, 4
          %s189 = int_to_ptr.vmem [resolvable:$true] %s188
          %194 = dma.hbm_to_vmem [thread:$0]  %s187, 256, %s189, %s178, 128, 128, 8
        $region28: #{tpu_custom_call.1} parent=23 // pred_fallthru
          _
        // Predicated region
        $region29: #{tpu_custom_call.1} parent=23 // pred_check
          %p195 = pneg %p65
        $region30: #{tpu_custom_call.1} parent=23 // pred_check_branch
          %197 = sbr.rel (%p195) target = $region32
        $region31: #{tpu_custom_call.1} parent=23 // pred_region
          %s198 = sand.u32 %s19, 1
          %s199 = scalar_lea.sflag [#allocation6], %s198
          %s200 = sand.u32 %s55, 1
          %s201 = smul.addr %s200, 16
          %s202 = scalar_lea.vmem [#allocation5], %s201
          %s204 = ssub.s32 256, 256
          %205 = vsyncadd %s199, %s204
          %s206 = smul.addr %s19, 2
          %s207 = smul.addr %s206, 128
          %s208 = scalar_lea.hbm %s1, %s207
          %s209 = sshll.u32 %s202, 4
          %s210 = int_to_ptr.vmem [resolvable:$true] %s209
          %215 = dma.hbm_to_vmem [thread:$0]  %s208, 256, %s210, %s199, 128, 128, 8
        $region32: #{tpu_custom_call.1} parent=23 // pred_fallthru
          _
      $region24: #{tpu_custom_call.1} parent=5 // pred_fallthru
        _
      %p216 = scmp.le.s32.totalorder 1, %s19
      %p217 = scmp.lt.s32.totalorder %s19, 3
      %p218 = pnand %p216, %p217
      %p219 = pneg %p218
      // Predicated region
      $region33: #{tpu_custom_call.1} parent=5 // pred_check
        _
      $region34: #{tpu_custom_call.1} parent=5 // pred_check_branch
        %221 = sbr.rel (%p218) target = $region36
      $region35: #{tpu_custom_call.1} parent=5 // pred_region
        %s222 = ssub.s32 %s19, 1
        %s223 = sand.u32 %s32, 1
        %s224 = scalar_lea.sflag [#allocation3], %s223
        %s225 = sand.u32 %s32, 1
        %s226 = smul.addr %s225, 16
        %s227 = scalar_lea.vmem [#allocation2], %s226
        // Predicated region
        $region37: #{tpu_custom_call.1} parent=35 // pred_check
          %p228 = pneg %p45
        $region38: #{tpu_custom_call.1} parent=35 // pred_check_branch
          %230 = sbr.rel (%p228) target = $region40
        $region39: #{tpu_custom_call.1} parent=35 // pred_region
          %231 = dma.done %s224, 256
        $region40: #{tpu_custom_call.1} parent=35 // pred_fallthru
          _
        %s232 = sand.u32 %s24, 1
        %s233 = scalar_lea.sflag [#allocation6], %s232
        %s234 = sand.u32 %s58, 1
        %s235 = smul.addr %s234, 16
        %s236 = scalar_lea.vmem [#allocation5], %s235
        // Predicated region
        $region41: #{tpu_custom_call.1} parent=35 // pred_check
          %p237 = pneg %p71
        $region42: #{tpu_custom_call.1} parent=35 // pred_check_branch
          %239 = sbr.rel (%p237) target = $region44
        $region43: #{tpu_custom_call.1} parent=35 // pred_region
          %240 = dma.done %s233, 256
        $region44: #{tpu_custom_call.1} parent=35 // pred_fallthru
          _
        // Predicated region
        $region45: #{tpu_custom_call.1} parent=35 // pred_check
          %p241 = pneg %p92
        $region46: #{tpu_custom_call.1} parent=35 // pred_check_branch
          %243 = sbr.rel (%p241) target = $region48
        $region47: #{tpu_custom_call.1} parent=35 // pred_region
          %244 = dma.done [#allocation6], 6144
        $region48: #{tpu_custom_call.1} parent=35 // pred_fallthru
          _
        %s245 = sand.u32 %s32, 1
        %s246 = scalar_lea.sflag [#allocation3], %s245
        %s247 = sand.u32 %s32, 1
        %s248 = smul.addr %s247, 16
        %s249 = scalar_lea.vmem [#allocation2], %s248
        %p250 = pneg %p45
        %p251 = pneg %p42
        %s252 = sand.u32 %s24, 1
        %s253 = scalar_lea.sflag [#allocation6], %s252
        %s254 = sand.u32 %s58, 1
        %s255 = smul.addr %s254, 16
        %s256 = scalar_lea.vmem [#allocation5], %s255
        %p257 = pneg %p71
        %p258 = pneg %p68
        %p259 = pneg %p92
        %p260 = pneg %p89
        %p261 = pneg %p113
        %p262 = pneg %p110
        %p263 = pneg %p139
        %p264 = pneg %p136
        %s265 = sand.u32 %s126, 1
        %s266 = scalar_lea.sflag [#allocation4], %s265
        %s267 = sand.u32 %s126, 1
        %s268 = smul.addr %s267, 16
        %s269 = scalar_lea.vmem [#allocation8], %s268
        %v270 = vld [vmem:[%s227] sm:$0xff]
        %v271 = vld [vmem:[%s227 + $0x8] sm:$0xff]
        %v272 = vld [vmem:[%s236] sm:$0xff]
        %v273 = vld [vmem:[%s236 + $0x8] sm:$0xff]
        %vm276 = vcmask 1040384
        %v277 = vrot.slane %v270, 7
        %v278 = vrot.slane %v271, 7
        %v279 = vsel %vm276, %v277, %v278
        %v283 = vsel %vm276, 0.0, %v277
        %v284 = vsel %vm276, %v278, 0.0
        %vm287 = vcmask 1046528
        %v288 = vrot.slane %v283, 1
        %v289 = vrot.slane %v279, 1
        %v290 = vsel %vm287, %v288, %v289
        %v291 = vrot.slane %v284, 1
        %v292 = vsel %vm287, %v289, %v291
        %vm295 = vcmask 1045504
        %v296 = vrot.slane %v283, 2
        %v297 = vrot.slane %v279, 2
        %v298 = vsel %vm295, %v296, %v297
        %v299 = vrot.slane %v284, 2
        %v300 = vsel %vm295, %v297, %v299
        %v303 = vld [vmem:[#allocation7] sm:$0xff]
        %v304 = vld [vmem:[#allocation7 + $0x8] sm:$0xff]
        %v305 = vld [vmem:[#allocation7 + $0x10] sm:$0xff]
        %v306 = vld [vmem:[#allocation7 + $0x18] sm:$0xff]
        %v307 = vld [vmem:[#allocation7 + $0x20] sm:$0xff]
        %v308 = vld [vmem:[#allocation7 + $0x28] sm:$0xff]
        %v309 = vld [vmem:[#allocation7 + $0x30] sm:$0xff]
        %v310 = vld [vmem:[#allocation7 + $0x38] sm:$0xff]
        %v311 = vld [vmem:[#allocation7 + $0x40] sm:$0xff]
        %v312 = vld [vmem:[#allocation7 + $0x48] sm:$0xff]
        %v313 = vld [vmem:[#allocation7 + $0x50] sm:$0xff]
        %v314 = vld [vmem:[#allocation7 + $0x58] sm:$0xff]
        %v315 = vld [vmem:[#allocation7 + $0x60] sm:$0xff]
        %v316 = vld [vmem:[#allocation7 + $0x68] sm:$0xff]
        %v317 = vld [vmem:[#allocation7 + $0x70] sm:$0xff]
        %v318 = vld [vmem:[#allocation7 + $0x78] sm:$0xff]
        %v319 = vld [vmem:[#allocation7 + $0x80] sm:$0xff]
        %v320 = vld [vmem:[#allocation7 + $0x88] sm:$0xff]
        %v321 = vld [vmem:[#allocation7 + $0x90] sm:$0xff]
        %v322 = vld [vmem:[#allocation7 + $0x98] sm:$0xff]
        %v323 = vld [vmem:[#allocation7 + $0xa0] sm:$0xff]
        %v324 = vld [vmem:[#allocation7 + $0xa8] sm:$0xff]
        %v325 = vld [vmem:[#allocation7 + $0xb0] sm:$0xff]
        %v326 = vld [vmem:[#allocation7 + $0xb8] sm:$0xff]
        %v327 = vld [vmem:[#allocation7 + $0xc0] sm:$0xff]
        %v328 = vld [vmem:[#allocation7 + $0xc8] sm:$0xff]
        %v329 = vld [vmem:[#allocation7 + $0xd0] sm:$0xff]
        %v330 = vld [vmem:[#allocation7 + $0xd8] sm:$0xff]
        %v331 = vld [vmem:[#allocation7 + $0xe0] sm:$0xff]
        %v332 = vld [vmem:[#allocation7 + $0xe8] sm:$0xff]
        %v333 = vld [vmem:[#allocation7 + $0xf0] sm:$0xff]
        %v334 = vld [vmem:[#allocation7 + $0xf8] sm:$0xff]
        %v335 = vld [vmem:[#allocation7 + $0x100] sm:$0xff]
        %v336 = vld [vmem:[#allocation7 + $0x108] sm:$0xff]
        %v337 = vld [vmem:[#allocation7 + $0x110] sm:$0xff]
        %v338 = vld [vmem:[#allocation7 + $0x118] sm:$0xff]
        %v339 = vld [vmem:[#allocation7 + $0x120] sm:$0xff]
        %v340 = vld [vmem:[#allocation7 + $0x128] sm:$0xff]
        %v341 = vld [vmem:[#allocation7 + $0x130] sm:$0xff]
        %v342 = vld [vmem:[#allocation7 + $0x138] sm:$0xff]
        %v343 = vld [vmem:[#allocation7 + $0x140] sm:$0xff]
        %v344 = vld [vmem:[#allocation7 + $0x148] sm:$0xff]
        %v345 = vld [vmem:[#allocation7 + $0x150] sm:$0xff]
        %v346 = vld [vmem:[#allocation7 + $0x158] sm:$0xff]
        %v347 = vld [vmem:[#allocation7 + $0x160] sm:$0xff]
        %v348 = vld [vmem:[#allocation7 + $0x168] sm:$0xff]
        %v349 = vld [vmem:[#allocation7 + $0x170] sm:$0xff]
        %v350 = vld [vmem:[#allocation7 + $0x178] sm:$0xff]
        %v351 = vld [vmem:[%s3] sm:$0x1]
        %v353 = vlaneseq
        %v354 = vshrl.u32 %v353, 7
        %v355 = vsub.s32 0, %v354
        %v356 = vrot.slane %v351, %v355
        %358 = vmatprep.subr.mxu0 0.0
        %359 = vmatpush1.msra.mxu0 %v303
        %360 = vmatprep.subr.mxu0 0.0
        %361 = vmatpush1.msra.mxu0 %v304
        %362 = vmatprep.subr.mxu0 0.0
        %363 = vmatpush1.msra.mxu0 %v305
        %364 = vmatprep.subr.mxu0 0.0
        %365 = vmatpush1.msra.mxu0 %v306
        %366 = vmatprep.subr.mxu0 0.0
        %367 = vmatpush1.msra.mxu0 %v307
        %368 = vmatprep.subr.mxu0 0.0
        %369 = vmatpush1.msra.mxu0 %v308
        %370 = vmatprep.subr.mxu0 0.0
        %371 = vmatpush1.msra.mxu0 %v309
        %372 = vmatprep.subr.mxu0 0.0
        %373 = vmatpush1.msra.mxu0 %v310
        %374 = vmatprep.subr.mxu0 0.0
        %375 = vmatpush1.msra.mxu0 %v311
        %376 = vmatprep.subr.mxu0 0.0
        %377 = vmatpush1.msra.mxu0 %v312
        %378 = vmatprep.subr.mxu0 0.0
        %379 = vmatpush1.msra.mxu0 %v313
        %380 = vmatprep.subr.mxu0 0.0
        %381 = vmatpush1.msra.mxu0 %v314
        %382 = vmatprep.subr.mxu0 0.0
        %383 = vmatpush1.msra.mxu0 %v315
        %384 = vmatprep.subr.mxu0 0.0
        %385 = vmatpush1.msra.mxu0 %v316
        %386 = vmatprep.subr.mxu0 0.0
        %387 = vmatpush1.msra.mxu0 %v317
        %388 = vmatprep.subr.mxu0 0.0
        %389 = vmatpush1.msra.mxu0 %v318
        %390 = vmatprep.subr.mxu0 0.0
        %391 = vmatpush1.msra.mxu0 %v319
        %392 = vmatprep.subr.mxu0 0.0
        %393 = vmatpush1.msra.mxu0 %v320
        %394 = vmatprep.subr.mxu0 0.0
        %395 = vmatpush1.msra.mxu0 %v321
        %396 = vmatprep.subr.mxu0 0.0
        %397 = vmatpush1.msra.mxu0 %v322
        %398 = vmatprep.subr.mxu0 0.0
        %399 = vmatpush1.msra.mxu0 %v323
        %400 = vmatprep.subr.mxu0 0.0
        %401 = vmatpush1.msra.mxu0 %v324
        %402 = vmatprep.subr.mxu0 0.0
        %403 = vmatpush1.msra.mxu0 %v325
        %404 = vmatprep.subr.mxu0 0.0
        %405 = vmatpush1.msra.mxu0 %v326
        %406 = vmatprep.subr.mxu0 0.0
        %407 = vmatpush1.msra.mxu0 %v327
        %408 = vmatprep.subr.mxu0 0.0
        %409 = vmatpush1.msra.mxu0 %v328
        %410 = vmatprep.subr.mxu0 0.0
        %411 = vmatpush1.msra.mxu0 %v329
        %412 = vmatprep.subr.mxu0 0.0
        %413 = vmatpush1.msra.mxu0 %v330
        %414 = vmatprep.subr.mxu0 0.0
        %415 = vmatpush1.msra.mxu0 %v331
        %416 = vmatprep.subr.mxu0 0.0
        %417 = vmatpush1.msra.mxu0 %v332
        %418 = vmatprep.subr.mxu0 0.0
        %419 = vmatpush1.msra.mxu0 %v333
        %420 = vmatprep.subr.mxu0 0.0
        %421 = vmatpush1.msra.mxu0 %v334
        %422 = vmatprep.mubr.f32.mxu0 %v290
        %423 = vmatmul.mubr.f32.gmra.mrb[0].mxu0 %v283
        %v424 = vpop.f32.mrb[0].mxu0
        %v425 = vadd.f32 %v356, %v424
        %v426 = vpop.f32.mrb[0].mxu0
        %427 = vmatprep.mubr.f32.mxu0 %v292
        %428 = vmatmul.mubr.f32.gmra.mrb[0].mxu0 %v279
        %v429 = vpop.f32.mrb[0].mxu0
        %v430 = vadd.f32 %v356, %v429
        %v431 = vpop.f32.mrb[0].mxu0
        %432 = vdwg.mxu0
        %433 = vmatprep.subr.mxu0 0.0
        %434 = vmatpush1.msra.mxu0 %v335
        %435 = vmatprep.subr.mxu0 0.0
        %436 = vmatpush1.msra.mxu0 %v336
        %437 = vmatprep.subr.mxu0 0.0
        %438 = vmatpush1.msra.mxu0 %v337
        %439 = vmatprep.subr.mxu0 0.0
        %440 = vmatpush1.msra.mxu0 %v338
        %441 = vmatprep.subr.mxu0 0.0
        %442 = vmatpush1.msra.mxu0 %v339
        %443 = vmatprep.subr.mxu0 0.0
        %444 = vmatpush1.msra.mxu0 %v340
        %445 = vmatprep.subr.mxu0 0.0
        %446 = vmatpush1.msra.mxu0 %v341
        %447 = vmatprep.subr.mxu0 0.0
        %448 = vmatpush1.msra.mxu0 %v342
        %449 = vmatprep.subr.mxu0 0.0
        %450 = vmatpush1.msra.mxu0 %v343
        %451 = vmatprep.subr.mxu0 0.0
        %452 = vmatpush1.msra.mxu0 %v344
        %453 = vmatprep.subr.mxu0 0.0
        %454 = vmatpush1.msra.mxu0 %v345
        %455 = vmatprep.subr.mxu0 0.0
        %456 = vmatpush1.msra.mxu0 %v346
        %457 = vmatprep.subr.mxu0 0.0
        %458 = vmatpush1.msra.mxu0 %v347
        %459 = vmatprep.subr.mxu0 0.0
        %460 = vmatpush1.msra.mxu0 %v348
        %461 = vmatprep.subr.mxu0 0.0
        %462 = vmatpush1.msra.mxu0 %v349
        %463 = vmatprep.subr.mxu0 0.0
        %464 = vmatpush1.msra.mxu0 %v350
        %465 = vmatprep.subr.mxu0 0.0
        %466 = vmatpush1.msra.mxu0 0.0
        %467 = vmatprep.subr.mxu0 0.0
        %468 = vmatpush1.msra.mxu0 0.0
        %469 = vmatprep.subr.mxu0 0.0
        %470 = vmatpush1.msra.mxu0 0.0
        %471 = vmatprep.subr.mxu0 0.0
        %472 = vmatpush1.msra.mxu0 0.0
        %473 = vmatprep.subr.mxu0 0.0
        %474 = vmatpush1.msra.mxu0 0.0
        %475 = vmatprep.subr.mxu0 0.0
        %476 = vmatpush1.msra.mxu0 0.0
        %477 = vmatprep.subr.mxu0 0.0
        %478 = vmatpush1.msra.mxu0 0.0
        %479 = vmatprep.subr.mxu0 0.0
        %480 = vmatpush1.msra.mxu0 0.0
        %481 = vmatprep.subr.mxu0 0.0
        %482 = vmatpush1.msra.mxu0 0.0
        %483 = vmatprep.subr.mxu0 0.0
        %484 = vmatpush1.msra.mxu0 0.0
        %485 = vmatprep.subr.mxu0 0.0
        %486 = vmatpush1.msra.mxu0 0.0
        %487 = vmatprep.subr.mxu0 0.0
        %488 = vmatpush1.msra.mxu0 0.0
        %489 = vmatprep.subr.mxu0 0.0
        %490 = vmatpush1.msra.mxu0 0.0
        %491 = vmatprep.subr.mxu0 0.0
        %492 = vmatpush1.msra.mxu0 0.0
        %493 = vmatprep.subr.mxu0 0.0
        %494 = vmatpush1.msra.mxu0 0.0
        %495 = vmatprep.subr.mxu0 0.0
        %496 = vmatpush1.msra.mxu0 0.0
        %497 = vmatprep.mubr.f32.mxu0 0.0
        %498 = vmatmul.mubr.f32.gmra.mrb[0].mxu0 %v298
        %v499 = vpop.f32.mrb[0].mxu0
        %v500 = vadd.f32 %v425, %v499
        %v501 = vpop.f32.mrb[0].mxu0
        %502 = vmatprep.mubr.f32.mxu0 0.0
        %503 = vmatmul.mubr.f32.gmra.mrb[0].mxu0 %v300
        %v504 = vpop.f32.mrb[0].mxu0
        %v505 = vadd.f32 %v430, %v504
        %v506 = vpop.f32.mrb[0].mxu0
        %507 = vdwg.mxu0
        %v508 = vmax.f32 %v500, 0.0
        %v509 = vmax.f32 %v505, 0.0
        %512 = vrot.lane.b32.xlu0 %v272, 120
        %v513 = vpop.permute.xlu0 %512
        %514 = vrot.lane.b32.xlu0 %v273, 120
        %v515 = vpop.permute.xlu0 %514
        %vm518 = vcmask 982016
        %v519 = vsel %vm518, %v513, %v272
        %v520 = vsel %vm518, %v515, %v273
        %521 = vrot.lane.b32.xlu0 %v272, 8
        %v522 = vpop.permute.xlu0 %521
        %523 = vrot.lane.b32.xlu0 %v273, 8
        %v524 = vpop.permute.xlu0 %523
        %vm527 = vcmask 64512
        %v528 = vsel %vm527, %v272, %v522
        %v529 = vsel %vm527, %v273, %v524
        %v530 = vmax.f32 %v272, %v519
        %v531 = vmax.f32 %v273, %v520
        %v532 = vmax.f32 %v530, %v528
        %v533 = vmax.f32 %v531, %v529
        %v536 = vrot.slane %v532, 7
        %v537 = vrot.slane %v533, 7
        %v538 = vsel %vm276, %v536, %v537
        %v542 = vrot.slane %v533, 6
        %v544 = vsel %vm276, %v532, %v536
        %v545 = vsel %vm276, %v537, %v542
        %v548 = vrot.slane %v544, 1
        %v549 = vrot.slane %v538, 1
        %v550 = vsel %vm287, %v548, %v549
        %v551 = vrot.slane %v545, 1
        %v552 = vsel %vm287, %v549, %v551
        %v555 = vmax.f32 %v544, %v550
        %v556 = vmax.f32 %v538, %v552
        %v557 = vrot.slane %v544, 2
        %v558 = vrot.slane %v538, 2
        %v559 = vsel %vm295, %v557, %v558
        %v560 = vrot.slane %v545, 2
        %v561 = vsel %vm295, %v558, %v560
        %v564 = vmax.f32 %v555, %v559
        %v565 = vmax.f32 %v556, %v561
        %v566 = vadd.f32 %v508, %v564
        %v567 = vadd.f32 %v509, %v565
        %568 = vst [vmem:[%s269] sm:$0xff] %v566
        %569 = vst [vmem:[%s269 + $0x8] sm:$0xff] %v567
        %s570 = sand.u32 %s126, 1
        %s571 = scalar_lea.sflag [#allocation4], %s570
        %s572 = sand.u32 %s126, 1
        %s573 = smul.addr %s572, 16
        %s574 = scalar_lea.vmem [#allocation8], %s573
        // Predicated region
        $region49: #{tpu_custom_call.1} parent=35 // pred_check
          %p575 = pneg %p136
        $region50: #{tpu_custom_call.1} parent=35 // pred_check_branch
          %577 = sbr.rel (%p575) target = $region52
        $region51: #{tpu_custom_call.1} parent=35 // pred_region
          %s579 = ssub.s32 256, 256
          %580 = vsyncadd %s571, %s579
          %s581 = smul.addr %s24, 2
          %s582 = smul.addr %s581, 128
          %s583 = scalar_lea.hbm %s4, %s582
          %s584 = sshll.u32 %s574, 4
          %s585 = int_to_ptr.vmem [resolvable:$true] %s584
          %590 = dma.vmem_to_hbm [thread:$0]  %s585, 256, %s583, %s571, 128, 128, 8
        $region52: #{tpu_custom_call.1} parent=35 // pred_fallthru
          _
      $region36: #{tpu_custom_call.1} parent=5 // pred_fallthru
        _
      %p591 = scmp.le.s32.totalorder 2, %s19
      // Predicated region
      $region53: #{tpu_custom_call.1} parent=5 // pred_check
        %p592 = pneg %p591
      $region54: #{tpu_custom_call.1} parent=5 // pred_check_branch
        %594 = sbr.rel (%p592) target = $region56
      $region55: #{tpu_custom_call.1} parent=5 // pred_region
        %s595 = ssub.s32 %s19, 2
        // Predicated region
        $region57: #{tpu_custom_call.1} parent=55 // pred_check
          %p596 = pneg %p142
        $region58: #{tpu_custom_call.1} parent=55 // pred_check_branch
          %598 = sbr.rel (%p596) target = $region60
        $region59: #{tpu_custom_call.1} parent=55 // pred_region
          %s599 = sand.u32 %s127, 1
          %s600 = scalar_lea.sflag [#allocation4], %s599
          %s601 = sand.u32 %s127, 1
          %s602 = smul.addr %s601, 16
          %s603 = scalar_lea.vmem [#allocation8], %s602
          %604 = dma.done %s600, 256
        $region60: #{tpu_custom_call.1} parent=55 // pred_fallthru
          _
      $region56: #{tpu_custom_call.1} parent=5 // pred_fallthru
        _
    $region6: #{tpu_custom_call.1} parent=1 // loop_footer
      %s23 = sadd.s32 1, %s19
    $region7: #{tpu_custom_call.1} parent=1 // loop_footer_branch
      %18 = sbr.rel target = $region3
    $region8: #{tpu_custom_call.1} parent=1 // loop_exit
      _
    %605 = vsyncpa [#allocation3], 1
    %s606 = scalar_lea.sflag [#allocation3], 1
    %607 = vsyncpa %s606, 1
    %608 = vsyncpa [#allocation6], 1
    %s609 = scalar_lea.sflag [#allocation6], 1
    %610 = vsyncpa %s609, 1
    %611 = vsyncpa [#allocation4], 1
    %s612 = scalar_lea.sflag [#allocation4], 1
    %613 = vsyncpa %s612, 1

</llo_original>
